<compile_context>
chip_gen: v7x
topology: tpu7x:2x2x1
jax: 0.10.0
libtpu: 0.0.40
codegen_flags: <defaults>
</compile_context>

<pallas_src>
import functools

import jax
import jax.numpy as jnp
from jax.experimental import pallas as pl
from jax.experimental.pallas import tpu as pltpu


def _tanh_kernel(x_ref, o_ref):
    # Elementwise tanh on the current VMEM tile (EUP). Compute in f32 (required
    # on v5e, which has no bf16 EUP; free elsewhere since EUP throughput is
    # nowhere near the bottleneck) and store back in the output dtype so HBM
    # traffic stays at the native width.
    o_ref[...] = jnp.tanh(x_ref[...].astype(jnp.float32)).astype(o_ref.dtype)


# Lane-dense widths to try (widest first); all multiples of 128.
_WIDTHS = (4096, 2048, 1024, 512, 256, 128)
# Keep at least this many grid steps for arrays bigger than ~1 MiB so the
# DMA-in / compute / DMA-out pipeline stays full and v7x's two TensorCores can
# split the block axis.
_MIN_BLOCKS = 8
_MIN_SPLIT_BYTES = 1 << 20


@functools.lru_cache(maxsize=None)
def _block_budget():
    """Per-chip (target_block_bytes, vmem_limit_bytes).

    Bigger blocks amortize the ~0.35 us fixed per-grid-step cost; the in-flight
    footprint is ~4 blocks (double-buffered input + output) and must stay well
    inside scoped VMEM.
      * 128 MiB VMEM parts (v5e/v6e): 4 MiB blocks (~16 MiB in flight). The
        v5e scoped-VMEM default is only 16 MiB, so raise the limit explicitly.
      * 64 MiB VMEM parts (v7x): HBM at ~3.2 TB/s makes per-step overhead ~20%
        at 2 MiB blocks, so use 6 MiB blocks (~24 MiB in flight), 48 MiB cap.
      * Unknown hardware: conservative 2 MiB blocks under the default limit.
    """
    try:
        vmem = pltpu.get_tpu_info().vmem_capacity_bytes
    except Exception:
        return 2 * 1024 * 1024, None
    if vmem >= 96 * 1024 * 1024:
        return 4 * 1024 * 1024, 64 * 1024 * 1024
    return 6 * 1024 * 1024, 48 * 1024 * 1024


def _pallas_tanh(x, *, donate):
    # torch.tanh promotes integer/bool inputs to the default float dtype.
    out_dtype = x.dtype if jnp.issubdtype(x.dtype, jnp.floating) else jnp.float32
    orig_shape = x.shape
    n = x.size
    if n == 0:
        return x.astype(out_dtype)

    if n % 128 != 0:
        # Ragged sizes (rare for NN tensors): XLA's fused elementwise tanh is a
        # single read+write pass at HBM roofline, strictly cheaper than a
        # pad -> kernel -> slice round trip (~3x the ideal 2n bytes).
        # TODO(synk): 1-D cdiv-grid Pallas path with a masked ragged tail block.
        return jnp.tanh(x.astype(jnp.float32)).astype(out_dtype)

    # Widest lane-dense width that divides the element count exactly (always
    # succeeds since n % 128 == 0) -> no padding; the block's last dim is the
    # full array width, so every block DMA is contiguous.
    width = next(w for w in _WIDTHS if n % w == 0)
    rows = n // width

    in_itemsize = x.dtype.itemsize
    out_itemsize = jnp.dtype(out_dtype).itemsize
    blk_itemsize = max(in_itemsize, out_itemsize)
    # Sublane packing multiple: 8 for 32-bit, 16 for 16-bit, 32 for 8-bit.
    sub = max(8, 32 // min(in_itemsize, out_itemsize))

    target_block_bytes, vmem_limit = _block_budget()
    target_rows = max(sub, (target_block_bytes // (width * blk_itemsize)) // sub * sub)
    if n * blk_itemsize > _MIN_SPLIT_BYTES:
        # Never emit a 1-step grid for mid-size arrays: cap the tile so there
        # are at least ~_MIN_BLOCKS pipelined grid steps.
        cap = max(sub, pl.cdiv(pl.cdiv(rows, _MIN_BLOCKS), sub) * sub)
        target_rows = min(target_rows, cap)
    tile_rows = rows if rows <= target_rows else target_rows
    grid = (pl.cdiv(rows, tile_rows),)

    x2d = x.reshape(rows, width)  # metadata-only under jit

    # Alias in->out only when the caller actually donated its buffer (see
    # pallas_tanh_donated). An unconditional alias on a live input makes XLA
    # insert a defensive full-array copy -> ~2x HBM traffic for a mem-bound op.
    alias = {0: 0} if (donate and out_dtype == x.dtype) else {}

    out2d = pl.pallas_call(
        _tanh_kernel,
        out_shape=jax.ShapeDtypeStruct((rows, width), out_dtype),
        grid_spec=pltpu.PrefetchScalarGridSpec(
            num_scalar_prefetch=0,
            grid=grid,
            in_specs=[pl.BlockSpec((tile_rows, width), lambda i: (i, 0))],
            out_specs=pl.BlockSpec((tile_rows, width), lambda i: (i, 0)),
        ),
        compiler_params=pltpu.CompilerParams(
            # "parallel" lets the runtime shard the row-block axis across
            # TensorCores on megacore parts.
            # TODO(synk): verify the v7x two-TC split in a profile; if absent,
            # switch to a size-2 CORE_PARALLEL leading axis.
            dimension_semantics=("parallel",),
            vmem_limit_bytes=vmem_limit,
        ),
        input_output_aliases=alias,
        cost_estimate=pl.CostEstimate(
            flops=0,
            transcendentals=n,
            bytes_accessed=n * (in_itemsize + out_itemsize),
        ),
    )(x2d)

    return out2d.reshape(orig_shape)


# Default entry point: no donation, no aliasing (caller keeps its input alive).
pallas_tanh = jax.jit(functools.partial(_pallas_tanh, donate=False))

# Donating variant: the caller's buffer is consumed and reused in place for the
# output (jit donation + input_output_aliases), avoiding a second full-size HBM
# allocation. The argument must not be used after this call.
pallas_tanh_donated = jax.jit(
    functools.partial(_pallas_tanh, donate=True), donate_argnums=0
)


class Lambda:
    """JAX/Pallas equivalent of the PyTorch Lambda(nn.Module) wrapper."""

    def __init__(self, func):
        self.func = func

    def __call__(self, x):
        return self.func(x)


if __name__ == "__main__":
    keys = jax.random.split(jax.random.PRNGKey(0), 4)
    lam = Lambda(pallas_tanh)

    # 1) Primary small NCHW input: batch=2, channels=4, 16x16, f32.
    x = jax.random.normal(keys[0], (2, 4, 16, 16), dtype=jnp.float32)
    ref = jnp.tanh(x)
    y = jax.block_until_ready(lam(x))
    assert y.shape == x.shape and y.dtype == x.dtype
    assert float(jnp.max(jnp.abs(y - ref))) < 1e-5

    # 2) Mid-size f32 tensor (2 MiB): exercises the multi-block pipelined grid.
    x2 = jax.random.normal(keys[1], (4, 128, 1024), dtype=jnp.float32)
    y2 = jax.block_until_ready(lam(x2))
    assert float(jnp.max(jnp.abs(y2 - jnp.tanh(x2)))) < 1e-5

    # 3) bf16 input: exercises the 16-bit sublane-packing path.
    x3 = jax.random.normal(keys[2], (2, 8, 64, 128), dtype=jnp.bfloat16)
    y3 = jax.block_until_ready(lam(x3))
    ref3 = jnp.tanh(x3.astype(jnp.float32))
    assert y3.dtype == jnp.bfloat16
    assert float(jnp.max(jnp.abs(y3.astype(jnp.float32) - ref3))) < 2e-2

    # 4) Ragged size (not a multiple of 128): fused-XLA fallback path.
    x4 = jax.random.normal(keys[3], (3, 5, 7), dtype=jnp.float32)
    y4 = jax.block_until_ready(lam(x4))
    assert float(jnp.max(jnp.abs(y4 - jnp.tanh(x4)))) < 1e-5

    # 5) Donating (in-place) variant; x5 is invalid after the call.
    x5 = jax.random.normal(keys[0], (2, 4, 16, 16), dtype=jnp.float32)
    ref5 = jnp.tanh(x5)  # computed before x5 is donated
    import warnings
    with warnings.catch_warnings():
        # Harmless if XLA declines to reuse the buffer; result is still correct.
        warnings.filterwarnings("ignore", message="Some donated buffers were not usable")
        y5 = jax.block_until_ready(pallas_tanh_donated(x5))
    assert float(jnp.max(jnp.abs(y5 - ref5))) < 1e-5

    print("KERNEL_OK")
</pallas_src>

<mosaic_0001>
module attributes {stable_mosaic.version = 11 : i64} {
  func.func @_tanh_kernel(%arg0: i32, %arg1: memref<1x2048xf32, #tpu.memory_space<vmem>>, %arg2: memref<1x2048xf32, #tpu.memory_space<vmem>>) attributes {dimension_semantics = [#tpu.dimension_semantics<parallel>], iteration_bounds = array<i64: 1>, scalar_prefetch = 0 : i64, scratch_operands = 0 : i64, tpu.core_type = #tpu.core_type<tc>, window_params = [{transform_indices = @transform_0, window_bounds = array<i64: 1, 2048>}, {transform_indices = @transform_1, window_bounds = array<i64: 1, 2048>}]} {
    %c0 = arith.constant 0 : index
    %c0_0 = arith.constant 0 : index
    %0 = vector.load %arg1[%c0, %c0_0] : memref<1x2048xf32, #tpu.memory_space<vmem>>, vector<1x2048xf32>
    %1 = math.tanh %0 : vector<1x2048xf32>
    %c0_1 = arith.constant 0 : index
    %c0_2 = arith.constant 0 : index
    %2 = vector.load %arg2[%c0_1, %c0_2] : memref<1x2048xf32, #tpu.memory_space<vmem>>, vector<1x2048xf32>
    tpu.vector_store %arg2[%c0_1, %c0_2], %1 {strides = array<i32>} : memref<1x2048xf32, #tpu.memory_space<vmem>>, vector<1x2048xf32>,
    return
  }
  func.func @transform_0(%arg0: i32) -> (i32, i32) {
    %c0_i32 = arith.constant 0 : i32
    %c0_i32_0 = arith.constant 0 : i32
    return %arg0, %c0_i32 : i32, i32
  }
  func.func @transform_1(%arg0: i32) -> (i32, i32) {
    %c0_i32 = arith.constant 0 : i32
    %c0_i32_0 = arith.constant 0 : i32
    return %arg0, %c0_i32 : i32, i32
  }
}

</mosaic_0001>

<llo_original>
// kernel: _pallas_tanh.1
$region0: #{_pallas_tanh.1}
  #allocation0 [shape = 'u32[]', space=smem, size = 0x4, offset = 0x4, fixed_abs, tag = 'smem constant byte address 0x4 - core index']
  #allocation1 [shape = 'u32[144,128]{1,0:T(1,128)}', space=vmem, size = 0x12000, scoped, tag = 'internal scratch']
  %s0 = inlined_call_operand.vmem [shape: f32[1,2048], index: 0, kind: input, shape index: {}]
  %s1 = inlined_call_operand.vmem [shape: f32[1,2048], index: 1, kind: output, shape index: {}]
  %s2 = sld [smem:[#allocation0]]
  $region14: #{_pallas_tanh.1} parent=0
    _
  %s4 = ssub.s32 1, %s2
  %s5 = scalar_select 0, %s4, %s2
  // Predicated region
  $region2: #{_pallas_tanh.1} parent=0 // pred_check
    _
  $region3: #{_pallas_tanh.1} parent=0 // pred_check_branch
    %7 = sbr.rel (0) target = $region5
  $region4: #{_pallas_tanh.1} parent=0 // pred_region
    _
  $region5: #{_pallas_tanh.1} parent=0 // pred_fallthru
    _
  %v8 = vld [vmem:[%s0] sm:$0xff]
  %v9 = vld [vmem:[%s0 + $0x8] sm:$0xff]
  %v10 = vtanh.pop %v8
  %v11 = vtanh.pop %v9
  %12 = vst [vmem:[%s1] sm:$0xff] %v10
  %13 = vst [vmem:[%s1 + $0x8] sm:$0xff] %v11
  // Predicated region
  $region6: #{_pallas_tanh.1} parent=0 // pred_check
    _
  $region7: #{_pallas_tanh.1} parent=0 // pred_check_branch
    %15 = sbr.rel (0) target = $region9
  $region8: #{_pallas_tanh.1} parent=0 // pred_region
    _
  $region9: #{_pallas_tanh.1} parent=0 // pred_fallthru
    _
  // Predicated region
  $region10: #{_pallas_tanh.1} parent=0 // pred_check
    _
  $region11: #{_pallas_tanh.1} parent=0 // pred_check_branch
    %17 = sbr.rel (0) target = $region13
  $region12: #{_pallas_tanh.1} parent=0 // pred_region
    _
  $region13: #{_pallas_tanh.1} parent=0 // pred_fallthru
    _

</llo_original>
